<compile_context>
chip_gen: v5e
topology: v5e:2x2
jax: 0.10.0
libtpu: 0.0.40
codegen_flags: <defaults>
</compile_context>

<pallas_src>
import jax
import jax.numpy as jnp
from jax.experimental import pallas as pl
from jax.experimental.pallas import tpu as pltpu


def _identity_kernel(z_ref, o_ref):
    # Pure pass-through of the current tile (the bottleneck's forward is z -> z).
    o_ref[...] = z_ref[...]


# Per-tile VMEM budget (bytes). With double-buffered input + output the live
# footprint is ~4x this, comfortably inside every generation's default scoped
# VMEM (16 MiB on v5e, 32 MiB on v6e/v7x).
_TILE_BYTES = 2 * 1024 * 1024


def abstract_bottleneck_forward(z):
    """Pallas implementation of AbstractBottleneck.forward (identity).

    z: (batch, feature_dim) array. Returns an array equal to z (same shape/dtype).
    """
    batch, feat = z.shape
    itemsize = jnp.dtype(z.dtype).itemsize
    row_bytes = feat * itemsize

    # Row-tile selection: whole array if it fits the per-tile budget, otherwise
    # the largest multiple-of-8 row count under the budget (feature dim stays
    # full-width on the lane axis -> unmasked, lane-dense stores).
    if batch * row_bytes <= _TILE_BYTES or batch <= 8:
        # TODO(synk): if a single row ever exceeds the VMEM budget (feature_dim
        # in the tens of millions), tile the feature axis as well.
        rows_per_tile = batch
    else:
        rows_per_tile = max(8, min(batch, (_TILE_BYTES // row_bytes) // 8 * 8))

    grid = (pl.cdiv(batch, rows_per_tile),)

    return pl.pallas_call(
        _identity_kernel,
        out_shape=jax.ShapeDtypeStruct(z.shape, z.dtype),
        grid=grid,
        in_specs=[pl.BlockSpec((rows_per_tile, feat), lambda i: (i, 0))],
        out_specs=pl.BlockSpec((rows_per_tile, feat), lambda i: (i, 0)),
        # The forward is z -> z: let the output alias the input buffer so no new
        # HBM allocation is made for the result.
        input_output_aliases={0: 0},
        compiler_params=pltpu.CompilerParams(
            dimension_semantics=("parallel",),
        ),
    )(z)


# TODO(synk): `loss` raises NotImplementedError and `update` is a no-op in the
# abstract class; there is no compute to translate for them.


if __name__ == "__main__":
    key = jax.random.PRNGKey(0)

    # Small shape consistent with a featurizer output feeding the bottleneck.
    batch, feature_dim = 2, 32
    z = jax.random.normal(key, (batch, feature_dim), dtype=jnp.float32)

    out = jax.block_until_ready(abstract_bottleneck_forward(z))

    # Recompute expected values from the same key (avoids relying on `z` after
    # the aliased call).
    expected = jax.random.normal(key, (batch, feature_dim), dtype=jnp.float32)
    assert out.shape == (batch, feature_dim) and out.dtype == jnp.float32
    assert bool(jnp.array_equal(out, expected))

    # Also exercise the row-tiled (multi-step grid) path once.
    key2 = jax.random.PRNGKey(1)
    batch2, feat2 = 4096, 256  # 4 MiB f32 -> 2 grid steps of (2048, 256) tiles
    z2 = jax.random.normal(key2, (batch2, feat2), dtype=jnp.float32)
    out2 = jax.block_until_ready(abstract_bottleneck_forward(z2))
    expected2 = jax.random.normal(key2, (batch2, feat2), dtype=jnp.float32)
    assert out2.shape == (batch2, feat2)
    assert bool(jnp.array_equal(out2, expected2))

    print("KERNEL_OK")
</pallas_src>

<mosaic_0001>
module attributes {stable_mosaic.version = 11 : i64} {
  func.func @_identity_kernel(%arg0: i32, %arg1: memref<2x32xf32, #tpu.memory_space<vmem>>, %arg2: memref<2x32xf32, #tpu.memory_space<vmem>>) attributes {dimension_semantics = [#tpu.dimension_semantics<parallel>], iteration_bounds = array<i64: 1>, scalar_prefetch = 0 : i64, scratch_operands = 0 : i64, tpu.core_type = #tpu.core_type<tc>, window_params = [{transform_indices = @transform_0, window_bounds = array<i64: 2, 32>}, {transform_indices = @transform_1, window_bounds = array<i64: 2, 32>}]} {
    %c0 = arith.constant 0 : index
    %c0_0 = arith.constant 0 : index
    %0 = vector.load %arg1[%c0, %c0_0] : memref<2x32xf32, #tpu.memory_space<vmem>>, vector<2x32xf32>
    %c0_1 = arith.constant 0 : index
    %c0_2 = arith.constant 0 : index
    %1 = vector.load %arg2[%c0_1, %c0_2] : memref<2x32xf32, #tpu.memory_space<vmem>>, vector<2x32xf32>
    tpu.vector_store %arg2[%c0_1, %c0_2], %0 {strides = array<i32>} : memref<2x32xf32, #tpu.memory_space<vmem>>, vector<2x32xf32>,
    return
  }
  func.func @transform_0(%arg0: i32) -> (i32, i32) {
    %c0_i32 = arith.constant 0 : i32
    %c0_i32_0 = arith.constant 0 : i32
    return %arg0, %c0_i32 : i32, i32
  }
  func.func @transform_1(%arg0: i32) -> (i32, i32) {
    %c0_i32 = arith.constant 0 : i32
    %c0_i32_0 = arith.constant 0 : i32
    return %arg0, %c0_i32 : i32, i32
  }
}

</mosaic_0001>

<llo_original>
// kernel: tpu_custom_call.1
$region0: #{tpu_custom_call.1}
  #allocation0 [shape = 'u32[]', space=smem, size = 0x4, offset = 0x4, fixed_abs, tag = 'smem constant byte address 0x4 - core index']
  #allocation1 [shape = 'u32[72,128]{1,0:T(1,128)}', space=vmem, size = 0x9000, scoped, tag = 'internal scratch']
  %s0 = inlined_call_operand.hbm [shape: f32[2,32], index: 0, kind: input, shape index: {}, may-alias: {0,1}]
  %s1 = inlined_call_operand.hbm [shape: f32[2,32], index: 1, kind: output, shape index: {}, may-alias: {0,1}]
  %s2 = sld [smem:[#allocation0]]
  $region18: #{tpu_custom_call.1} parent=0
    _
  %s4 = ssub.s32 1, %s2
  %s5 = scalar_select 0, %s4, %s2
  $region1: #{tpu_custom_call.1} parent=0
    #allocation2 [shape = 'u8[1024]{0}', space=vmem, size = 0x400, scoped, tag = 'input window, operand 0, single buffered']
    #allocation3 [shape = 's32[1]{0}', space=sflag, size = 0x4, scoped, tag = 'scoped memory for tpu_custom_call.1']
    #allocation4 [shape = 's32[1]{0}', space=sflag, size = 0x4, scoped, tag = 'scoped memory for tpu_custom_call.1']
    #allocation5 [shape = 'u8[1024]{0}', space=vmem, size = 0x400, scoped, tag = 'output window, operand 0, single buffered']
    %6 = vsyncpa [#allocation3], 0
    %7 = vsyncpa [#allocation4], 0
    // Predicated region
    $region2: #{tpu_custom_call.1} parent=1 // pred_check
      _
    $region3: #{tpu_custom_call.1} parent=1 // pred_check_branch
      %9 = sbr.rel (0) target = $region5
    $region4: #{tpu_custom_call.1} parent=1 // pred_region
      %11 = vsyncadd [#allocation3], 0
      %s13 = sshll.u32 %s0, 4
      %s14 = int_to_ptr.hbm [resolvable:$true] %s13
      %s15 = sshll.u32 [#allocation2], 4
      %s16 = int_to_ptr.vmem [resolvable:$true] %s15
      %18 = dma.hbm_to_vmem [thread:$0]  %s14, 32, %s16, [#allocation3]
    $region5: #{tpu_custom_call.1} parent=1 // pred_fallthru
      _
    // Predicated region
    $region6: #{tpu_custom_call.1} parent=1 // pred_check
      _
    $region7: #{tpu_custom_call.1} parent=1 // pred_check_branch
      %20 = sbr.rel (0) target = $region9
    $region8: #{tpu_custom_call.1} parent=1 // pred_region
      %22 = dma.done [#allocation3], 32
    $region9: #{tpu_custom_call.1} parent=1 // pred_fallthru
      _
    %v23 = vld [vmem:[#allocation2] sm:$0x3]
    %vm24 = vcmask 254976
    %25 = vst.msk [vmem:[#allocation5] sm:$0x3] %vm24, %v23
    // Predicated region
    $region10: #{tpu_custom_call.1} parent=1 // pred_check
      _
    $region11: #{tpu_custom_call.1} parent=1 // pred_check_branch
      %27 = sbr.rel (0) target = $region13
    $region12: #{tpu_custom_call.1} parent=1 // pred_region
      %29 = vsyncadd [#allocation4], 0
      %s31 = sshll.u32 [#allocation5], 4
      %s32 = int_to_ptr.vmem [resolvable:$true] %s31
      %s33 = sshll.u32 %s1, 4
      %s34 = int_to_ptr.hbm [resolvable:$true] %s33
      %36 = dma.vmem_to_hbm [thread:$0]  %s32, 32, %s34, [#allocation4]
    $region13: #{tpu_custom_call.1} parent=1 // pred_fallthru
      _
    // Predicated region
    $region14: #{tpu_custom_call.1} parent=1 // pred_check
      _
    $region15: #{tpu_custom_call.1} parent=1 // pred_check_branch
      %38 = sbr.rel (0) target = $region17
    $region16: #{tpu_custom_call.1} parent=1 // pred_region
      %40 = dma.done [#allocation4], 32
    $region17: #{tpu_custom_call.1} parent=1 // pred_fallthru
      _
    %41 = vsyncpa [#allocation3], 1
    %42 = vsyncpa [#allocation4], 1

</llo_original>
